<compile_context>
chip_gen: v6e
topology: v6e:2x2x1
jax: 0.10.0
libtpu: 0.0.40
codegen_flags: <defaults>
</compile_context>

<pallas_src>
import jax
import jax.numpy as jnp
from jax import lax
from jax.experimental import pallas as pl
from jax.experimental.pallas import tpu as pltpu

P_DROP = 0.3
BN_EPS = 1e-5
# Dropout as an unsigned-integer compare: drop iff bits < P_DROP * 2**32.
_DROP_THRESHOLD = int(round(P_DROP * (1 << 32)))


def fc_unit_kernel(x_ref, w_ref, gamma_ref, beta_ref, bits_ref, o_ref):
    # ---- Linear (MXU).  W is in PyTorch layout (out_f_tile, in_f); contract the
    # last dims so no wrapper-side transpose is needed.  The linear bias is
    # omitted: the training-mode BatchNorm that follows subtracts the batch
    # mean, which cancels the bias exactly (variance unaffected).
    y = lax.dot_general(
        x_ref[...], w_ref[...],
        dimension_numbers=(((1,), (1,)), ((), ())),
        preferred_element_type=jnp.float32,
    )                                                        # (N, TILE_N) f32

    # ---- BatchNorm1d, training mode (batch stats, biased variance), with the
    # affine transform and the dropout 1/(1-p) scale folded into a single
    # per-feature scale/shift -> only 2 full-width VPU ops on (N, TILE_N).
    mean = jnp.mean(y, axis=0, keepdims=True)                # (1, TILE_N)
    var = jnp.mean(jnp.square(y - mean), axis=0, keepdims=True)
    bn_scale = gamma_ref[...] * lax.rsqrt(var + BN_EPS)      # (1, TILE_N)
    inv_keep = 1.0 / (1.0 - P_DROP)
    scale = bn_scale * inv_keep
    shift = (beta_ref[...] - mean * bn_scale) * inv_keep
    z = y * scale + shift                                    # (N, TILE_N)

    # ---- Dropout(p) + ReLU fused: one u32 compare + one select.
    keep = bits_ref[...] >= jnp.uint32(_DROP_THRESHOLD)
    o_ref[...] = jnp.where(keep & (z > 0.0), z, 0.0)


def _round_up(x, m):
    return (x + m - 1) // m * m


def fc_unit(x, w, b, gamma, beta, dropout_key, *, compute_dtype=jnp.float32):
    """FcUnit forward (training mode): Linear -> BatchNorm1d -> Dropout(0.3) -> ReLU.

    x: (N, in_f) f32; w: (out_f, in_f) (PyTorch layout); b/gamma/beta: (out_f,).
    `b` is accepted for API parity but is mathematically cancelled by the
    training-mode BatchNorm, so it is unused.  On v6e/v7x pass
    compute_dtype=jnp.bfloat16 for full MXU rate (f32 accumulation; BN /
    dropout / ReLU stay f32).
    """
    del b  # exactly cancelled by training-mode BN (no running stats emitted)
    n, in_f = x.shape
    out_f = w.shape[0]

    # Lane-dense tiling over out_f: TILE_N a multiple of 128, modest enough for
    # v7x's 64 MiB VMEM with double-buffered inputs.
    tile_n = 256 if out_f >= 256 else 128
    out_f_p = _round_up(out_f, tile_n)
    grid = (out_f_p // tile_n,)

    xd = x.astype(compute_dtype)
    wd = w.astype(compute_dtype)
    gamma_f = gamma.astype(jnp.float32)
    beta_f = beta.astype(jnp.float32)
    if out_f_p != out_f:
        pad = out_f_p - out_f
        wd = jnp.pad(wd, ((0, pad), (0, 0)))
        gamma_f = jnp.pad(gamma_f, (0, pad), constant_values=1.0)
        beta_f = jnp.pad(beta_f, (0, pad))
    gamma2 = gamma_f.reshape(1, out_f_p)
    beta2 = beta_f.reshape(1, out_f_p)

    # Dropout randomness from the stateless JAX PRNG (portable; the in-kernel
    # cost is a single u32 compare per element).
    # TODO(synk): RNG stream differs from torch.nn.Dropout.
    bits = jax.random.bits(dropout_key, (n, out_f_p), dtype=jnp.uint32)

    itemsize = jnp.dtype(compute_dtype).itemsize
    cost = pl.CostEstimate(
        flops=2 * n * in_f * out_f_p,
        transcendentals=0,
        bytes_accessed=(n * in_f * itemsize          # x
                        + out_f_p * in_f * itemsize  # W
                        + 2 * out_f_p * 4            # gamma, beta
                        + n * out_f_p * 4            # dropout bits
                        + n * out_f_p * 4),          # output
    )

    out_p = pl.pallas_call(
        fc_unit_kernel,
        out_shape=jax.ShapeDtypeStruct((n, out_f_p), jnp.float32),
        grid=grid,
        in_specs=[
            pl.BlockSpec((n, in_f), lambda j: (0, 0)),        # x (resident)
            pl.BlockSpec((tile_n, in_f), lambda j: (j, 0)),   # W tile
            pl.BlockSpec((1, tile_n), lambda j: (0, j)),      # gamma tile
            pl.BlockSpec((1, tile_n), lambda j: (0, j)),      # beta tile
            pl.BlockSpec((n, tile_n), lambda j: (0, j)),      # dropout bits
        ],
        out_specs=pl.BlockSpec((n, tile_n), lambda j: (0, j)),
        compiler_params=pltpu.CompilerParams(
            dimension_semantics=("parallel",)),
        cost_estimate=cost,
    )(xd, wd, gamma2, beta2, bits)

    return out_p[:, :out_f] if out_f_p != out_f else out_p


if __name__ == "__main__":
    # Small shapes consistent with FcUnit(in_f=32, out_f=32) on a batch of 8.
    N, IN_F, OUT_F = 8, 32, 32
    key = jax.random.PRNGKey(0)
    kx, kw, kb, kd = jax.random.split(key, 4)

    x = jax.random.normal(kx, (N, IN_F), dtype=jnp.float32)

    # Deterministic parameter init mimicking PyTorch defaults:
    #   nn.Linear: U(-1/sqrt(in_f), 1/sqrt(in_f)) for W and b
    #   nn.BatchNorm1d: gamma=1, beta=0
    bound = 1.0 / (IN_F ** 0.5)
    w = jax.random.uniform(kw, (OUT_F, IN_F), minval=-bound, maxval=bound,
                           dtype=jnp.float32)
    b = jax.random.uniform(kb, (OUT_F,), minval=-bound, maxval=bound,
                           dtype=jnp.float32)
    gamma = jnp.ones((OUT_F,), jnp.float32)
    beta = jnp.zeros((OUT_F,), jnp.float32)

    out = fc_unit(x, w, b, gamma, beta, kd)
    jax.block_until_ready(out)
    assert out.shape == (N, OUT_F) and out.dtype == jnp.float32
    assert bool(jnp.isfinite(out).all()) and bool(jnp.all(out >= 0.0))
    print("KERNEL_OK")
</pallas_src>

<mosaic_0001>
module attributes {stable_mosaic.version = 11 : i64} {
  func.func @fc_unit_kernel(%arg0: i32, %arg1: memref<8x32xf32, #tpu.memory_space<vmem>>, %arg2: memref<128x32xf32, #tpu.memory_space<vmem>>, %arg3: memref<1x128xf32, #tpu.memory_space<vmem>>, %arg4: memref<1x128xf32, #tpu.memory_space<vmem>>, %arg5: memref<8x128xi32, #tpu.memory_space<vmem>>, %arg6: memref<8x128xf32, #tpu.memory_space<vmem>>) attributes {dimension_semantics = [#tpu.dimension_semantics<parallel>], iteration_bounds = array<i64: 1>, scalar_prefetch = 0 : i64, scratch_operands = 0 : i64, tpu.core_type = #tpu.core_type<tc>, window_params = [{pipeline_mode = #tpu.pipeline_mode<synchronous>, transform_indices = @transform_0, window_bounds = array<i64: 8, 32>}, {transform_indices = @transform_1, window_bounds = array<i64: 128, 32>}, {transform_indices = @transform_2, window_bounds = array<i64: 1, 128>}, {transform_indices = @transform_3, window_bounds = array<i64: 1, 128>}, {transform_indices = @transform_4, window_bounds = array<i64: 8, 128>}, {transform_indices = @transform_5, window_bounds = array<i64: 8, 128>}]} {
    %c0 = arith.constant 0 : index
    %c0_0 = arith.constant 0 : index
    %0 = vector.load %arg1[%c0, %c0_0] : memref<8x32xf32, #tpu.memory_space<vmem>>, vector<8x32xf32>
    %c0_1 = arith.constant 0 : index
    %c0_2 = arith.constant 0 : index
    %1 = vector.load %arg2[%c0_1, %c0_2] : memref<128x32xf32, #tpu.memory_space<vmem>>, vector<128x32xf32>
    %cst = arith.constant dense<0.000000e+00> : vector<8x128xf32>
    %2 = tpu.matmul %0, %1, %cst {dimension_numbers = #tpu.dot_dimension_numbers<[1], [1], [0], [0], [0, 0, 1, 0], [], []>} : vector<8x32xf32>, vector<128x32xf32>, vector<8x128xf32> -> vector<8x128xf32>
    %cst_3 = arith.constant dense<0.000000e+00> : vector<128xf32>
    %3 = vector.multi_reduction <add>, %2, %cst_3 [0] : vector<8x128xf32> to vector<128xf32>
    %4 = vector.shape_cast %3 : vector<128xf32> to vector<1x128xf32>
    %cst_4 = arith.constant 8.000000e+00 : f32
    %5 = vector.broadcast %cst_4 : f32 to vector<1x128xf32>
    %6 = arith.divf %4, %5 : vector<1x128xf32>
    %7 = vector.broadcast %6 : vector<1x128xf32> to vector<8x128xf32>
    %8 = arith.subf %2, %7 : vector<8x128xf32>
    %9 = arith.mulf %8, %8 : vector<8x128xf32>
    %cst_5 = arith.constant dense<0.000000e+00> : vector<128xf32>
    %10 = vector.multi_reduction <add>, %9, %cst_5 [0] : vector<8x128xf32> to vector<128xf32>
    %11 = vector.shape_cast %10 : vector<128xf32> to vector<1x128xf32>
    %cst_6 = arith.constant 8.000000e+00 : f32
    %12 = vector.broadcast %cst_6 : f32 to vector<1x128xf32>
    %13 = arith.divf %11, %12 : vector<1x128xf32>
    %c0_7 = arith.constant 0 : index
    %c0_8 = arith.constant 0 : index
    %14 = vector.load %arg3[%c0_7, %c0_8] : memref<1x128xf32, #tpu.memory_space<vmem>>, vector<1x128xf32>
    %cst_9 = arith.constant 9.99999974E-6 : f32
    %15 = vector.broadcast %cst_9 : f32 to vector<1x128xf32>
    %16 = arith.addf %13, %15 : vector<1x128xf32>
    %17 = math.rsqrt %16 : vector<1x128xf32>
    %18 = arith.mulf %14, %17 : vector<1x128xf32>
    %cst_10 = arith.constant 1.42857146 : f32
    %19 = vector.broadcast %cst_10 : f32 to vector<1x128xf32>
    %20 = arith.mulf %18, %19 : vector<1x128xf32>
    %c0_11 = arith.constant 0 : index
    %c0_12 = arith.constant 0 : index
    %21 = vector.load %arg4[%c0_11, %c0_12] : memref<1x128xf32, #tpu.memory_space<vmem>>, vector<1x128xf32>
    %22 = arith.mulf %6, %18 : vector<1x128xf32>
    %23 = arith.subf %21, %22 : vector<1x128xf32>
    %cst_13 = arith.constant 1.42857146 : f32
    %24 = vector.broadcast %cst_13 : f32 to vector<1x128xf32>
    %25 = arith.mulf %23, %24 : vector<1x128xf32>
    %26 = vector.broadcast %20 : vector<1x128xf32> to vector<8x128xf32>
    %27 = arith.mulf %2, %26 : vector<8x128xf32>
    %28 = vector.broadcast %25 : vector<1x128xf32> to vector<8x128xf32>
    %29 = arith.addf %27, %28 : vector<8x128xf32>
    %c0_14 = arith.constant 0 : index
    %c0_15 = arith.constant 0 : index
    %30 = vector.load %arg5[%c0_14, %c0_15] : memref<8x128xi32, #tpu.memory_space<vmem>>, vector<8x128xi32>
    %c1288490189_i32 = arith.constant 1288490189 : i32
    %31 = vector.broadcast %c1288490189_i32 : i32 to vector<8x128xi32>
    %32 = arith.cmpi uge, %30, %31 : vector<8x128xi32>
    %cst_16 = arith.constant 0.000000e+00 : f32
    %33 = vector.broadcast %cst_16 : f32 to vector<8x128xf32>
    %34 = arith.cmpf ogt, %29, %33 : vector<8x128xf32>
    %35 = arith.andi %32, %34 : vector<8x128xi1>
    %cst_17 = arith.constant 0.000000e+00 : f32
    %36 = vector.broadcast %cst_17 : f32 to vector<8x128xf32>
    %37 = arith.select %35, %29, %36 : vector<8x128xi1>, vector<8x128xf32>
    %c0_18 = arith.constant 0 : index
    %c0_19 = arith.constant 0 : index
    %38 = vector.load %arg6[%c0_18, %c0_19] : memref<8x128xf32, #tpu.memory_space<vmem>>, vector<8x128xf32>
    tpu.vector_store %arg6[%c0_18, %c0_19], %37 {strides = array<i32>} : memref<8x128xf32, #tpu.memory_space<vmem>>, vector<8x128xf32>,
    return
  }
  func.func @transform_0(%arg0: i32) -> (i32, i32) {
    %c0_i32 = arith.constant 0 : i32
    %c0_i32_0 = arith.constant 0 : i32
    %c0_i32_1 = arith.constant 0 : i32
    return %c0_i32, %c0_i32_0 : i32, i32
  }
  func.func @transform_1(%arg0: i32) -> (i32, i32) {
    %c0_i32 = arith.constant 0 : i32
    %c0_i32_0 = arith.constant 0 : i32
    return %arg0, %c0_i32 : i32, i32
  }
  func.func @transform_2(%arg0: i32) -> (i32, i32) {
    %c0_i32 = arith.constant 0 : i32
    %c0_i32_0 = arith.constant 0 : i32
    return %c0_i32, %arg0 : i32, i32
  }
  func.func @transform_3(%arg0: i32) -> (i32, i32) {
    %c0_i32 = arith.constant 0 : i32
    %c0_i32_0 = arith.constant 0 : i32
    return %c0_i32, %arg0 : i32, i32
  }
  func.func @transform_4(%arg0: i32) -> (i32, i32) {
    %c0_i32 = arith.constant 0 : i32
    %c0_i32_0 = arith.constant 0 : i32
    return %c0_i32, %arg0 : i32, i32
  }
  func.func @transform_5(%arg0: i32) -> (i32, i32) {
    %c0_i32 = arith.constant 0 : i32
    %c0_i32_0 = arith.constant 0 : i32
    return %c0_i32, %arg0 : i32, i32
  }
}

</mosaic_0001>

<llo_original>
// kernel: tpu_custom_call.1
$region0: #{tpu_custom_call.1}
  #allocation0 [shape = 'u32[]', space=smem, size = 0x4, offset = 0x4, fixed_abs, tag = 'smem constant byte address 0x4 - core index']
  #allocation1 [shape = 'u32[144,128]{1,0:T(1,128)}', space=vmem, size = 0x12000, scoped, tag = 'internal scratch']
  %s0 = inlined_call_operand.vmem [shape: f32[8,32], index: 0, kind: input, shape index: {}]
  %s1 = inlined_call_operand.vmem [shape: f32[128,32], index: 1, kind: input, shape index: {}]
  %s2 = inlined_call_operand.vmem [shape: f32[1,128], index: 2, kind: input, shape index: {}]
  %s3 = inlined_call_operand.vmem [shape: f32[1,128], index: 3, kind: input, shape index: {}]
  %s4 = inlined_call_operand.vmem [shape: u32[8,128], index: 4, kind: input, shape index: {}]
  %s5 = inlined_call_operand.hbm [shape: f32[8,128], index: 5, kind: output, shape index: {}]
  %s6 = sld [smem:[#allocation0]]
  $region30: #{tpu_custom_call.1} parent=0
    _
  %s8 = ssub.s32 1, %s6
  %s9 = scalar_select 0, %s8, %s6
  $region1: #{tpu_custom_call.1} parent=0
    #allocation2 [shape = 'u8[4096]{0}', space=vmem, size = 0x1000, scoped, tag = 'output window, operand 0, single buffered']
    #allocation3 [shape = 's32[1]{0}', space=sflag, size = 0x4, scoped, tag = 'scoped memory for tpu_custom_call.1']
    %10 = vsyncpa [#allocation3], 0
    // Predicated region
    $region2: #{tpu_custom_call.1} parent=1 // pred_check
      _
    $region3: #{tpu_custom_call.1} parent=1 // pred_check_branch
      %12 = sbr.rel (0) target = $region5
    $region4: #{tpu_custom_call.1} parent=1 // pred_region
      _
    $region5: #{tpu_custom_call.1} parent=1 // pred_fallthru
      _
    // Predicated region
    $region6: #{tpu_custom_call.1} parent=1 // pred_check
      _
    $region7: #{tpu_custom_call.1} parent=1 // pred_check_branch
      %14 = sbr.rel (0) target = $region9
    $region8: #{tpu_custom_call.1} parent=1 // pred_region
      _
    $region9: #{tpu_custom_call.1} parent=1 // pred_fallthru
      _
    // Predicated region
    $region10: #{tpu_custom_call.1} parent=1 // pred_check
      _
    $region11: #{tpu_custom_call.1} parent=1 // pred_check_branch
      %16 = sbr.rel (0) target = $region13
    $region12: #{tpu_custom_call.1} parent=1 // pred_region
      _
    $region13: #{tpu_custom_call.1} parent=1 // pred_fallthru
      _
    // Predicated region
    $region14: #{tpu_custom_call.1} parent=1 // pred_check
      _
    $region15: #{tpu_custom_call.1} parent=1 // pred_check_branch
      %18 = sbr.rel (0) target = $region17
    $region16: #{tpu_custom_call.1} parent=1 // pred_region
      _
    $region17: #{tpu_custom_call.1} parent=1 // pred_fallthru
      _
    // Predicated region
    $region18: #{tpu_custom_call.1} parent=1 // pred_check
      _
    $region19: #{tpu_custom_call.1} parent=1 // pred_check_branch
      %20 = sbr.rel (0) target = $region21
    $region20: #{tpu_custom_call.1} parent=1 // pred_region
      _
    $region21: #{tpu_custom_call.1} parent=1 // pred_fallthru
      _
    %v21 = vld [vmem:[%s0] sm:$0xff]
    %v22 = vld [vmem:[%s1] sm:$0xff]
    %v23 = vld [vmem:[%s1 + $0x8] sm:$0xff]
    %v24 = vld [vmem:[%s1 + $0x10] sm:$0xff]
    %v25 = vld [vmem:[%s1 + $0x18] sm:$0xff]
    %v26 = vld [vmem:[%s1 + $0x20] sm:$0xff]
    %v27 = vld [vmem:[%s1 + $0x28] sm:$0xff]
    %v28 = vld [vmem:[%s1 + $0x30] sm:$0xff]
    %v29 = vld [vmem:[%s1 + $0x38] sm:$0xff]
    %v30 = vld [vmem:[%s1 + $0x40] sm:$0xff]
    %v31 = vld [vmem:[%s1 + $0x48] sm:$0xff]
    %v32 = vld [vmem:[%s1 + $0x50] sm:$0xff]
    %v33 = vld [vmem:[%s1 + $0x58] sm:$0xff]
    %v34 = vld [vmem:[%s1 + $0x60] sm:$0xff]
    %v35 = vld [vmem:[%s1 + $0x68] sm:$0xff]
    %v36 = vld [vmem:[%s1 + $0x70] sm:$0xff]
    %v37 = vld [vmem:[%s1 + $0x78] sm:$0xff]
    %vm38 = vcmask 261120
    %v40 = vsel %vm38, %v21, 0
    %v43 = vsel %vm38, %v22, 0
    %v46 = vsel %vm38, %v23, 0
    %v49 = vsel %vm38, %v24, 0
    %v52 = vsel %vm38, %v25, 0
    %v55 = vsel %vm38, %v26, 0
    %v58 = vsel %vm38, %v27, 0
    %v61 = vsel %vm38, %v28, 0
    %v64 = vsel %vm38, %v29, 0
    %v67 = vsel %vm38, %v30, 0
    %v70 = vsel %vm38, %v31, 0
    %v73 = vsel %vm38, %v32, 0
    %v76 = vsel %vm38, %v33, 0
    %v79 = vsel %vm38, %v34, 0
    %v82 = vsel %vm38, %v35, 0
    %v85 = vsel %vm38, %v36, 0
    %v88 = vsel %vm38, %v37, 0
    %90 = vmatprep.subr.mxu0 0.0
    %91 = vmatpush1.xpose.msra.mxu0 %v88
    %92 = vmatprep.subr.mxu0 0.0
    %93 = vmatpush1.xpose.msra.mxu0 %v85
    %94 = vmatprep.subr.mxu0 0.0
    %95 = vmatpush1.xpose.msra.mxu0 %v82
    %96 = vmatprep.subr.mxu0 0.0
    %97 = vmatpush1.xpose.msra.mxu0 %v79
    %98 = vmatprep.subr.mxu0 0.0
    %99 = vmatpush1.xpose.msra.mxu0 %v76
    %100 = vmatprep.subr.mxu0 0.0
    %101 = vmatpush1.xpose.msra.mxu0 %v73
    %102 = vmatprep.subr.mxu0 0.0
    %103 = vmatpush1.xpose.msra.mxu0 %v70
    %104 = vmatprep.subr.mxu0 0.0
    %105 = vmatpush1.xpose.msra.mxu0 %v67
    %106 = vmatprep.subr.mxu0 0.0
    %107 = vmatpush1.xpose.msra.mxu0 %v64
    %108 = vmatprep.subr.mxu0 0.0
    %109 = vmatpush1.xpose.msra.mxu0 %v61
    %110 = vmatprep.subr.mxu0 0.0
    %111 = vmatpush1.xpose.msra.mxu0 %v58
    %112 = vmatprep.subr.mxu0 0.0
    %113 = vmatpush1.xpose.msra.mxu0 %v55
    %114 = vmatprep.subr.mxu0 0.0
    %115 = vmatpush1.xpose.msra.mxu0 %v52
    %116 = vmatprep.subr.mxu0 0.0
    %117 = vmatpush1.xpose.msra.mxu0 %v49
    %118 = vmatprep.subr.mxu0 0.0
    %119 = vmatpush1.xpose.msra.mxu0 %v46
    %120 = vmatprep.subr.mxu0 0.0
    %121 = vmatpush1.xpose.msra.mxu0 %v43
    %122 = vmatprep.subr.mxu0 0.0
    %123 = vmatpush2.xpose.msra.mxu0 0.0
    %124 = vmatprep.subr.mxu0 0.0
    %125 = vmatpush2.xpose.msra.mxu0 0.0
    %126 = vmatprep.subr.mxu0 0.0
    %127 = vmatpush2.xpose.msra.mxu0 0.0
    %128 = vmatprep.subr.mxu0 0.0
    %129 = vmatpush2.xpose.msra.mxu0 0.0
    %130 = vmatprep.subr.mxu0 0.0
    %131 = vmatpush2.xpose.msra.mxu0 0.0
    %132 = vmatprep.subr.mxu0 0.0
    %133 = vmatpush2.xpose.msra.mxu0 0.0
    %134 = vmatprep.subr.mxu0 0.0
    %135 = vmatpush2.xpose.msra.mxu0 0.0
    %136 = vmatprep.subr.mxu0 0.0
    %137 = vmatpush2.xpose.msra.mxu0 0.0
    %138 = vmatprep.subr.mxu0 0.0
    %139 = vmatpush2.xpose.msra.mxu0 0.0
    %140 = vmatprep.subr.mxu0 0.0
    %141 = vmatpush2.xpose.msra.mxu0 0.0
    %142 = vmatprep.subr.mxu0 0.0
    %143 = vmatpush2.xpose.msra.mxu0 0.0
    %144 = vmatprep.subr.mxu0 0.0
    %145 = vmatpush2.xpose.msra.mxu0 0.0
    %146 = vmatprep.subr.mxu0 0.0
    %147 = vmatpush2.xpose.msra.mxu0 0.0
    %148 = vmatprep.subr.mxu0 0.0
    %149 = vmatpush2.xpose.msra.mxu0 0.0
    %150 = vmatprep.subr.mxu0 0.0
    %151 = vmatpush2.xpose.msra.mxu0 0.0
    %152 = vmatprep.subr.mxu0 0.0
    %153 = vmatpush2.xpose.msra.mxu0 0.0
    %154 = vmatprep.mubr.f32.mxu0 0.0
    %155 = vmatmul.mubr.f32.gmra.mxu0 %v40
    %v156 = vpop.f32.mrf.mxu0
    %v157 = vadd.f32 0.0, %v156
    %v158 = vpop.f32.mrf.mxu0
    %159 = vdwg.mxu0
    %v160 = vrot.slane %v157, 4
    %v161 = vadd.f32 %v157, %v160
    %v162 = vrot.slane %v161, 2
    %v163 = vadd.f32 %v161, %v162
    %v164 = vrot.slane %v163, 1
    %v165 = vadd.f32 %v163, %v164
    %v166 = vrcp.pop 8.0
    %v167 = vmul.f32 %v165, %v166
    %v168 = vsub.f32 %v157, %v167
    %v169 = vmul.f32 %v168, %v168
    %v170 = vrot.slane %v169, 4
    %v171 = vadd.f32 %v169, %v170
    %v172 = vrot.slane %v171, 2
    %v173 = vadd.f32 %v171, %v172
    %v174 = vrot.slane %v173, 1
    %v175 = vadd.f32 %v173, %v174
    %v176 = vmul.f32 %v175, %v166
    %v177 = vld [vmem:[%s2] sm:$0x1]
    %v178 = vadd.f32 %v176, 1e-05
    %v179 = vrsqrt.pop %v178
    %v180 = vmul.f32 %v177, %v179
    %v181 = vmul.f32 %v180, 1.4285715
    %v182 = vld [vmem:[%s3] sm:$0x1]
    %v183 = vmul.f32 %v167, %v180
    %v184 = vsub.f32 %v182, %v183
    %v185 = vmul.f32 %v184, 1.4285715
    %v187 = vlaneseq
    %v188 = vshrl.u32 %v187, 7
    %v189 = vsub.s32 0, %v188
    %v190 = vrot.slane %v181, %v189
    %v192 = vmul.f32 %v157, %v190
    %v194 = vlaneseq
    %v195 = vshrl.u32 %v194, 7
    %v196 = vsub.s32 0, %v195
    %v197 = vrot.slane %v185, %v196
    %v199 = vadd.f32 %v192, %v197
    %v200 = vld [vmem:[%s4] sm:$0xff]
    %vm201 = vcmp.ge.u32.totalorder %v200, 1288490189
    %vm202 = vcmp.gt.f32.partialorder %v199, 0.0
    %vm203 = vmand %vm201, %vm202
    %v204 = vsel %vm203, %v199, 0.0
    %205 = vst [vmem:[#allocation2] sm:$0xff] %v204
    // Predicated region
    $region22: #{tpu_custom_call.1} parent=1 // pred_check
      _
    $region23: #{tpu_custom_call.1} parent=1 // pred_check_branch
      %207 = sbr.rel (0) target = $region25
    $region24: #{tpu_custom_call.1} parent=1 // pred_region
      %s209 = ssub.s32 128, 128
      %210 = vsyncadd [#allocation3], %s209
      %s212 = sshll.u32 [#allocation2], 4
      %s213 = int_to_ptr.vmem [resolvable:$true] %s212
      %215 = dma.vmem_to_hbm [thread:$0]  %s213, 128, %s5, [#allocation3]
    $region25: #{tpu_custom_call.1} parent=1 // pred_fallthru
      _
    // Predicated region
    $region26: #{tpu_custom_call.1} parent=1 // pred_check
      _
    $region27: #{tpu_custom_call.1} parent=1 // pred_check_branch
      %217 = sbr.rel (0) target = $region29
    $region28: #{tpu_custom_call.1} parent=1 // pred_region
      %218 = dma.done [#allocation3], 128
    $region29: #{tpu_custom_call.1} parent=1 // pred_fallthru
      _
    %219 = vsyncpa [#allocation3], 1

</llo_original>
